<compile_context>
chip_gen: v5e
topology: v5e:2x2
jax: 0.10.0
libtpu: 0.0.40
codegen_flags: <defaults>
</compile_context>

<pallas_src>
import functools

import jax
import jax.numpy as jnp
from jax.experimental import pallas as pl
from jax.experimental.pallas import tpu as pltpu


# ---------------------------------------------------------------------------
# Shared kernel pieces
# ---------------------------------------------------------------------------

def _accumulate(x_ref, sum_acc, max_acc, *, hw, t_hw, ragged, hw_axis):
    """One streaming step of sum/max pooling over the flattened HW axis.

    x_ref:   (1, T_C, T_HW) input block (original dtype)
    sum_acc: (T_C, 1) f32 running sum (VMEM scratch)
    max_acc: (T_C, 1) f32 running max (VMEM scratch)
    """
    t = pl.program_id(hw_axis)

    @pl.when(t == 0)
    def _init():
        sum_acc[...] = jnp.zeros_like(sum_acc)
        max_acc[...] = jnp.full_like(max_acc, -jnp.inf)

    x = x_ref[0].astype(jnp.float32)                       # (T_C, T_HW)

    def _update(x_sum, x_max):
        sum_acc[...] += jnp.sum(x_sum, axis=-1, keepdims=True)
        max_acc[...] = jnp.maximum(max_acc[...],
                                   jnp.max(x_max, axis=-1, keepdims=True))

    if ragged:
        last = pl.num_programs(hw_axis) - 1

        # Plain path for every full tile (no extra VPU work on the stream).
        @pl.when(t < last)
        def _plain():
            _update(x, x)

        # Masking only on the final, partial tile.
        @pl.when(t == last)
        def _masked():
            lane = jax.lax.broadcasted_iota(jnp.int32, x.shape, 1)
            valid = (t * t_hw + lane) < hw
            _update(jnp.where(valid, x, 0.0), jnp.where(valid, x, -jnp.inf))
    else:
        _update(x, x)


def _mlp_sigmoid(avg, mx, w1t, w2):
    """sigmoid(ce(avg) + ce(max)) for one batch item.

    avg, mx: (C, 1) f32 pooled stats
    w1t:     (C, hidden) f32  (= W1 transposed)
    w2:      (C, hidden) f32
    Returns (C, 1) f32.  Uses only broadcast-multiplies and reductions so it
    lowers robustly for tiny `hidden` (= C // ratio).
    """
    h = (jnp.maximum(jnp.sum(w1t * avg, axis=0, keepdims=True), 0.0)
         + jnp.maximum(jnp.sum(w1t * mx, axis=0, keepdims=True), 0.0))   # (1, hidden)
    y = jnp.sum(w2 * h, axis=1, keepdims=True)                           # (C, 1)
    return jax.nn.sigmoid(y)


# ---------------------------------------------------------------------------
# Kernels
# ---------------------------------------------------------------------------

def _fused_pool_mlp_kernel(x_ref, w1t_ref, w2_ref, o_ref, sum_acc, max_acc, *,
                           hw, t_hw, inv_hw, ragged):
    """Streaming pooling + fused MLP + sigmoid.  grid = (B, n_hw)."""
    _accumulate(x_ref, sum_acc, max_acc,
                hw=hw, t_hw=t_hw, ragged=ragged, hw_axis=1)

    @pl.when(pl.program_id(1) == pl.num_programs(1) - 1)
    def _finalize():
        avg = sum_acc[...] * inv_hw                        # (C, 1)
        mx = max_acc[...]                                  # (C, 1)
        y = _mlp_sigmoid(avg, mx,
                         w1t_ref[...].astype(jnp.float32),
                         w2_ref[...].astype(jnp.float32))
        o_ref[0] = y.astype(o_ref.dtype)                   # (C, 1), cast in-kernel


def _pool_kernel(x_ref, avg_ref, max_ref, sum_acc, max_acc, *,
                 hw, t_hw, inv_hw, ragged):
    """Pooling only (used when C is split for dual-TC).  grid = (B, n_c, n_hw)."""
    _accumulate(x_ref, sum_acc, max_acc,
                hw=hw, t_hw=t_hw, ragged=ragged, hw_axis=2)

    @pl.when(pl.program_id(2) == pl.num_programs(2) - 1)
    def _finalize():
        avg_ref[0] = sum_acc[...] * inv_hw                 # (T_C, 1)
        max_ref[0] = max_acc[...]                          # (T_C, 1)


def _mlp_kernel(avg_ref, max_ref, w1t_ref, w2_ref, o_ref):
    """Per-batch shared MLP + sigmoid on pooled stats.  grid = (B,)."""
    y = _mlp_sigmoid(avg_ref[0].astype(jnp.float32),
                     max_ref[0].astype(jnp.float32),
                     w1t_ref[...].astype(jnp.float32),
                     w2_ref[...].astype(jnp.float32))
    o_ref[0] = y.astype(o_ref.dtype)


# ---------------------------------------------------------------------------
# Tiling helpers
# ---------------------------------------------------------------------------

def _split_channels(b, c):
    """Return (t_c, n_c).  Guarantee >= 2 'parallel' grid units for v7x's two
    TensorCores: when B == 1 (and C splits cleanly), halve the C tile."""
    if b >= 2:
        return c, 1
    if c % 2 == 0 and (c // 2) % 8 == 0:
        return c // 2, 2
    return c, 1


def _pick_hw_tile(hw, t_c, itemsize, per_buffer_budget):
    """Largest lane-aligned HW tile whose block fits `per_buffer_budget`;
    prefer a full-HW tile (fully contiguous DMA, no ragged path)."""
    max_lanes = max(128, per_buffer_budget // (t_c * itemsize))
    t_hw = (max_lanes // 128) * 128
    if hw <= t_hw:
        return hw
    return t_hw


# ---------------------------------------------------------------------------
# Public wrapper
# ---------------------------------------------------------------------------

def channel_attention(x_nchw, w1, w2, *, hw_tile=None,
                      vmem_limit_bytes=30 * 1024 * 1024,
                      hw_buffer_budget_bytes=12 * 1024 * 1024):
    """x_nchw: (B, C, H, W); w1: (hidden, C); w2: (C, hidden). Returns (B, C, 1, 1)."""
    B, C, H, W = x_nchw.shape
    hidden = w1.shape[0]
    assert w1.shape == (hidden, C), "w1 must be (C//ratio, C)"
    assert w2.shape == (C, hidden), "w2 must be (C, C//ratio)"
    HW = H * W

    # Keep original dtype (no wrapper upcast); accumulate in f32 in VMEM.
    x = x_nchw.reshape(B, C, HW)
    itemsize = x.dtype.itemsize

    t_c, n_c = _split_channels(B, C)

    if hw_tile is not None:
        assert hw_tile % 128 == 0, "hw_tile must be a multiple of 128"
        # Clamp so each DMA row is at least ~2 KiB.
        min_lanes = max(128, 2048 // itemsize)
        t_hw = max(hw_tile, min_lanes)
        if t_hw >= HW:
            t_hw = HW
    else:
        t_hw = _pick_hw_tile(HW, t_c, itemsize, hw_buffer_budget_bytes)
    n_hw = pl.cdiv(HW, t_hw)
    ragged = (HW % t_hw) != 0

    w1t = jnp.asarray(w1).T                      # (C, hidden) -- tiny
    w2m = jnp.asarray(w2)                        # (C, hidden) -- tiny

    if n_c == 1:
        # Single fused kernel: streaming pooling + MLP + sigmoid at finalize.
        fused = functools.partial(_fused_pool_mlp_kernel, hw=HW, t_hw=t_hw,
                                  inv_hw=1.0 / HW, ragged=ragged)
        out = pl.pallas_call(
            fused,
            out_shape=jax.ShapeDtypeStruct((B, C, 1), x.dtype),
            grid_spec=pltpu.PrefetchScalarGridSpec(
                num_scalar_prefetch=0,
                grid=(B, n_hw),
                in_specs=[
                    pl.BlockSpec((1, C, t_hw), lambda b, t: (b, 0, t)),
                    pl.BlockSpec((C, hidden), lambda b, t: (0, 0)),   # w1t, VMEM-resident
                    pl.BlockSpec((C, hidden), lambda b, t: (0, 0)),   # w2,  VMEM-resident
                ],
                out_specs=pl.BlockSpec((1, C, 1), lambda b, t: (b, 0, 0)),
                scratch_shapes=[
                    pltpu.VMEM((C, 1), jnp.float32),
                    pltpu.VMEM((C, 1), jnp.float32),
                ],
            ),
            compiler_params=pltpu.CompilerParams(
                dimension_semantics=("parallel", "arbitrary"),
                vmem_limit_bytes=vmem_limit_bytes,
            ),
        )(x, w1t, w2m)
        return out.reshape(B, C, 1, 1)

    # --- Split-C path (B == 1): 2 parallel C tiles keep both v7x TCs busy. ---
    pool = functools.partial(_pool_kernel, hw=HW, t_hw=t_hw,
                             inv_hw=1.0 / HW, ragged=ragged)
    avg_out, max_out = pl.pallas_call(
        pool,
        out_shape=(jax.ShapeDtypeStruct((B, C, 1), jnp.float32),
                   jax.ShapeDtypeStruct((B, C, 1), jnp.float32)),
        grid_spec=pltpu.PrefetchScalarGridSpec(
            num_scalar_prefetch=0,
            grid=(B, n_c, n_hw),
            in_specs=[
                pl.BlockSpec((1, t_c, t_hw), lambda b, c, t: (b, c, t)),
            ],
            out_specs=[
                pl.BlockSpec((1, t_c, 1), lambda b, c, t: (b, c, 0)),
                pl.BlockSpec((1, t_c, 1), lambda b, c, t: (b, c, 0)),
            ],
            scratch_shapes=[
                pltpu.VMEM((t_c, 1), jnp.float32),
                pltpu.VMEM((t_c, 1), jnp.float32),
            ],
        ),
        compiler_params=pltpu.CompilerParams(
            dimension_semantics=("parallel", "parallel", "arbitrary"),
            vmem_limit_bytes=vmem_limit_bytes,
        ),
    )(x)

    # Tiny per-batch MLP + sigmoid on pooled stats (consumes (1,C,1) blocks
    # directly -- no relayout between the two calls).
    out = pl.pallas_call(
        _mlp_kernel,
        out_shape=jax.ShapeDtypeStruct((B, C, 1), x.dtype),
        grid_spec=pltpu.PrefetchScalarGridSpec(
            num_scalar_prefetch=0,
            grid=(B,),
            in_specs=[
                pl.BlockSpec((1, C, 1), lambda b: (b, 0, 0)),
                pl.BlockSpec((1, C, 1), lambda b: (b, 0, 0)),
                pl.BlockSpec((C, hidden), lambda b: (0, 0)),
                pl.BlockSpec((C, hidden), lambda b: (0, 0)),
            ],
            out_specs=pl.BlockSpec((1, C, 1), lambda b: (b, 0, 0)),
        ),
        compiler_params=pltpu.CompilerParams(
            dimension_semantics=("parallel",)),
    )(avg_out, max_out, w1t, w2m)
    return out.reshape(B, C, 1, 1)


# ---------------------------------------------------------------------------
# Reference + tests
# ---------------------------------------------------------------------------

def _reference(x_nchw, w1, w2):
    x = x_nchw.astype(jnp.float32)
    avg = jnp.mean(x, axis=(2, 3))                 # (B, C)
    mx = jnp.max(x, axis=(2, 3))                   # (B, C)

    def mlp(v):
        h = jnp.maximum(v @ w1.astype(jnp.float32).T, 0.0)
        return h @ w2.astype(jnp.float32).T

    out = jax.nn.sigmoid(mlp(avg) + mlp(mx))       # (B, C)
    return out[:, :, None, None].astype(x_nchw.dtype)


if __name__ == "__main__":
    key = jax.random.PRNGKey(0)
    kx, k1, k2, kx2, kx3, k3, k4 = jax.random.split(key, 7)

    # 1) Primary: B=2, C=64, 16x16, ratio=16 -> hidden=4. Fused path, single HW tile.
    B, C, H, W = 2, 64, 16, 16
    hidden = C // 16
    x = jax.random.normal(kx, (B, C, H, W), dtype=jnp.float32)
    w1 = jax.random.normal(k1, (hidden, C), dtype=jnp.float32) * (2.0 / C) ** 0.5
    w2 = jax.random.normal(k2, (C, hidden), dtype=jnp.float32) * (2.0 / hidden) ** 0.5

    out = jax.block_until_ready(channel_attention(x, w1, w2))
    ref = _reference(x, w1, w2)
    assert out.shape == (B, C, 1, 1)
    assert jnp.allclose(out, ref, atol=1e-5, rtol=1e-5), "mismatch (fused, single tile)"

    # 2) Fused path, multi-tile + ragged last HW tile (HW=1296, tiles of 512).
    x_big = jax.random.normal(kx2, (B, C, 36, 36), dtype=jnp.float32)
    out_big = jax.block_until_ready(channel_attention(x_big, w1, w2, hw_tile=512))
    ref_big = _reference(x_big, w1, w2)
    assert jnp.allclose(out_big, ref_big, atol=1e-5, rtol=1e-5), "mismatch (fused, ragged)"

    # 3) Split-C path (B=1 -> 2 parallel C tiles) + MLP kernel, ragged HW tiles.
    B2, C2 = 1, 32
    hidden2 = C2 // 16
    x2 = jax.random.normal(kx3, (B2, C2, 36, 36), dtype=jnp.float32)
    w1b = jax.random.normal(k3, (hidden2, C2), dtype=jnp.float32) * (2.0 / C2) ** 0.5
    w2b = jax.random.normal(k4, (C2, hidden2), dtype=jnp.float32) * (2.0 / hidden2) ** 0.5
    out2 = jax.block_until_ready(channel_attention(x2, w1b, w2b, hw_tile=512))
    ref2 = _reference(x2, w1b, w2b)
    assert jnp.allclose(out2, ref2, atol=1e-5, rtol=1e-5), "mismatch (split-C, ragged)"

    print("KERNEL_OK")
</pallas_src>

<mosaic_0001>
module attributes {stable_mosaic.version = 11 : i64} {
  func.func @_fused_pool_mlp_kernel(%arg0: i32, %arg1: i32, %arg2: memref<1x64x256xf32, #tpu.memory_space<vmem>>, %arg3: memref<64x4xf32, #tpu.memory_space<vmem>>, %arg4: memref<64x4xf32, #tpu.memory_space<vmem>>, %arg5: memref<1x64x1xf32, #tpu.memory_space<vmem>>, %arg6: memref<64x1xf32, #tpu.memory_space<vmem>>, %arg7: memref<64x1xf32, #tpu.memory_space<vmem>>) attributes {dimension_semantics = [#tpu.dimension_semantics<parallel>, #tpu.dimension_semantics<arbitrary>], iteration_bounds = array<i64: 2, 1>, scalar_prefetch = 0 : i64, scratch_operands = 2 : i64, tpu.core_type = #tpu.core_type<tc>, window_params = [{transform_indices = @transform_0, window_bounds = array<i64: 1, 64, 256>}, {pipeline_mode = #tpu.pipeline_mode<synchronous>, transform_indices = @transform_1, window_bounds = array<i64: 64, 4>}, {pipeline_mode = #tpu.pipeline_mode<synchronous>, transform_indices = @transform_2, window_bounds = array<i64: 64, 4>}, {transform_indices = @transform_3, window_bounds = array<i64: 1, 64, 1>}]} {
    %c0_i32 = arith.constant 0 : i32
    %0 = arith.cmpi eq, %arg1, %c0_i32 : i32
    %1 = arith.extui %0 : i1 to i32
    %c0_i32_0 = arith.constant 0 : i32
    %2 = arith.cmpi ne, %1, %c0_i32_0 : i32
    scf.if %2 {
      %cst_14 = arith.constant 0.000000e+00 : f32
      %18 = vector.broadcast %cst_14 : f32 to vector<64x1xf32>
      %c0_15 = arith.constant 0 : index
      %c0_16 = arith.constant 0 : index
      %19 = vector.load %arg6[%c0_15, %c0_16] : memref<64x1xf32, #tpu.memory_space<vmem>>, vector<64x1xf32>
      tpu.vector_store %arg6[%c0_15, %c0_16], %18 {strides = array<i32>} : memref<64x1xf32, #tpu.memory_space<vmem>>, vector<64x1xf32>,
      %cst_17 = arith.constant 0xFF800000 : f32
      %20 = vector.broadcast %cst_17 : f32 to vector<64x1xf32>
      %c0_18 = arith.constant 0 : index
      %c0_19 = arith.constant 0 : index
      %21 = vector.load %arg7[%c0_18, %c0_19] : memref<64x1xf32, #tpu.memory_space<vmem>>, vector<64x1xf32>
      tpu.vector_store %arg7[%c0_18, %c0_19], %20 {strides = array<i32>} : memref<64x1xf32, #tpu.memory_space<vmem>>, vector<64x1xf32>,
    } else {
    }
    %c0 = arith.constant 0 : index
    %c0_1 = arith.constant 0 : index
    %c0_2 = arith.constant 0 : index
    %3 = vector.load %arg2[%c0, %c0_1, %c0_2] : memref<1x64x256xf32, #tpu.memory_space<vmem>>, vector<1x64x256xf32>
    %4 = vector.shape_cast %3 : vector<1x64x256xf32> to vector<64x256xf32>
    %c0_3 = arith.constant 0 : index
    %c0_4 = arith.constant 0 : index
    %5 = vector.load %arg6[%c0_3, %c0_4] : memref<64x1xf32, #tpu.memory_space<vmem>>, vector<64x1xf32>
    %cst = arith.constant dense<0.000000e+00> : vector<64xf32>
    %6 = vector.multi_reduction <add>, %4, %cst [1] : vector<64x256xf32> to vector<64xf32>
    %7 = vector.shape_cast %6 : vector<64xf32> to vector<64x1xf32>
    %8 = arith.addf %5, %7 : vector<64x1xf32>
    %c0_5 = arith.constant 0 : index
    %c0_6 = arith.constant 0 : index
    %9 = vector.load %arg6[%c0_5, %c0_6] : memref<64x1xf32, #tpu.memory_space<vmem>>, vector<64x1xf32>
    tpu.vector_store %arg6[%c0_5, %c0_6], %8 {strides = array<i32>} : memref<64x1xf32, #tpu.memory_space<vmem>>, vector<64x1xf32>,
    %c0_7 = arith.constant 0 : index
    %c0_8 = arith.constant 0 : index
    %10 = vector.load %arg7[%c0_7, %c0_8] : memref<64x1xf32, #tpu.memory_space<vmem>>, vector<64x1xf32>
    %cst_9 = arith.constant dense<0xFF800000> : vector<64xf32>
    %11 = vector.multi_reduction <maximumf>, %4, %cst_9 [1] : vector<64x256xf32> to vector<64xf32>
    %12 = vector.shape_cast %11 : vector<64xf32> to vector<64x1xf32>
    %13 = arith.maximumf %10, %12 : vector<64x1xf32>
    %c0_10 = arith.constant 0 : index
    %c0_11 = arith.constant 0 : index
    %14 = vector.load %arg7[%c0_10, %c0_11] : memref<64x1xf32, #tpu.memory_space<vmem>>, vector<64x1xf32>
    tpu.vector_store %arg7[%c0_10, %c0_11], %13 {strides = array<i32>} : memref<64x1xf32, #tpu.memory_space<vmem>>, vector<64x1xf32>,
    %c0_i32_12 = arith.constant 0 : i32
    %15 = arith.cmpi eq, %arg1, %c0_i32_12 : i32
    %16 = arith.extui %15 : i1 to i32
    %c0_i32_13 = arith.constant 0 : i32
    %17 = arith.cmpi ne, %16, %c0_i32_13 : i32
    scf.if %17 {
      %c0_14 = arith.constant 0 : index
      %c0_15 = arith.constant 0 : index
      %18 = vector.load %arg6[%c0_14, %c0_15] : memref<64x1xf32, #tpu.memory_space<vmem>>, vector<64x1xf32>
      %cst_16 = arith.constant 3.906250e-03 : f32
      %19 = vector.broadcast %cst_16 : f32 to vector<64x1xf32>
      %20 = arith.mulf %18, %19 : vector<64x1xf32>
      %c0_17 = arith.constant 0 : index
      %c0_18 = arith.constant 0 : index
      %21 = vector.load %arg7[%c0_17, %c0_18] : memref<64x1xf32, #tpu.memory_space<vmem>>, vector<64x1xf32>
      %c0_19 = arith.constant 0 : index
      %c0_20 = arith.constant 0 : index
      %22 = vector.load %arg3[%c0_19, %c0_20] : memref<64x4xf32, #tpu.memory_space<vmem>>, vector<64x4xf32>
      %c0_21 = arith.constant 0 : index
      %c0_22 = arith.constant 0 : index
      %23 = vector.load %arg4[%c0_21, %c0_22] : memref<64x4xf32, #tpu.memory_space<vmem>>, vector<64x4xf32>
      %24 = vector.broadcast %20 : vector<64x1xf32> to vector<64x4xf32>
      %25 = arith.mulf %22, %24 : vector<64x4xf32>
      %cst_23 = arith.constant dense<0.000000e+00> : vector<4xf32>
      %26 = vector.multi_reduction <add>, %25, %cst_23 [0] : vector<64x4xf32> to vector<4xf32>
      %27 = vector.shape_cast %26 : vector<4xf32> to vector<1x4xf32>
      %cst_24 = arith.constant 0.000000e+00 : f32
      %28 = vector.broadcast %cst_24 : f32 to vector<1x4xf32>
      %29 = arith.maximumf %27, %28 : vector<1x4xf32>
      %30 = vector.broadcast %21 : vector<64x1xf32> to vector<64x4xf32>
      %31 = arith.mulf %22, %30 : vector<64x4xf32>
      %cst_25 = arith.constant dense<0.000000e+00> : vector<4xf32>
      %32 = vector.multi_reduction <add>, %31, %cst_25 [0] : vector<64x4xf32> to vector<4xf32>
      %33 = vector.shape_cast %32 : vector<4xf32> to vector<1x4xf32>
      %cst_26 = arith.constant 0.000000e+00 : f32
      %34 = vector.broadcast %cst_26 : f32 to vector<1x4xf32>
      %35 = arith.maximumf %33, %34 : vector<1x4xf32>
      %36 = arith.addf %29, %35 : vector<1x4xf32>
      %37 = vector.broadcast %36 : vector<1x4xf32> to vector<64x4xf32>
      %38 = arith.mulf %23, %37 : vector<64x4xf32>
      %cst_27 = arith.constant dense<0.000000e+00> : vector<64xf32>
      %39 = vector.multi_reduction <add>, %38, %cst_27 [1] : vector<64x4xf32> to vector<64xf32>
      %40 = vector.shape_cast %39 : vector<64xf32> to vector<64x1xf32>
      %41 = arith.negf %40 : vector<64x1xf32>
      %42 = math.exp %41 : vector<64x1xf32>
      %cst_28 = arith.constant 1.000000e+00 : f32
      %43 = vector.broadcast %cst_28 : f32 to vector<64x1xf32>
      %44 = arith.addf %43, %42 : vector<64x1xf32>
      %45 = arith.divf %43, %44 : vector<64x1xf32>
      %c0_29 = arith.constant 0 : index
      %c0_30 = arith.constant 0 : index
      %c0_31 = arith.constant 0 : index
      %46 = vector.load %arg5[%c0_29, %c0_30, %c0_31] : memref<1x64x1xf32, #tpu.memory_space<vmem>>, vector<1x64x1xf32>
      %47 = vector.shape_cast %46 : vector<1x64x1xf32> to vector<64x1xf32>
      %48 = vector.shape_cast %45 : vector<64x1xf32> to vector<1x64x1xf32>
      tpu.vector_store %arg5[%c0_29, %c0_30, %c0_31], %48 {strides = array<i32>} : memref<1x64x1xf32, #tpu.memory_space<vmem>>, vector<1x64x1xf32>,
    } else {
    }
    return
  }
  func.func @transform_0(%arg0: i32, %arg1: i32) -> (i32, i32, i32) {
    %c0_i32 = arith.constant 0 : i32
    %c0_i32_0 = arith.constant 0 : i32
    return %arg0, %c0_i32, %arg1 : i32, i32, i32
  }
  func.func @transform_1(%arg0: i32, %arg1: i32) -> (i32, i32) {
    %c0_i32 = arith.constant 0 : i32
    %c0_i32_0 = arith.constant 0 : i32
    %c0_i32_1 = arith.constant 0 : i32
    return %c0_i32, %c0_i32_0 : i32, i32
  }
  func.func @transform_2(%arg0: i32, %arg1: i32) -> (i32, i32) {
    %c0_i32 = arith.constant 0 : i32
    %c0_i32_0 = arith.constant 0 : i32
    %c0_i32_1 = arith.constant 0 : i32
    return %c0_i32, %c0_i32_0 : i32, i32
  }
  func.func @transform_3(%arg0: i32, %arg1: i32) -> (i32, i32, i32) {
    %c0_i32 = arith.constant 0 : i32
    %c0_i32_0 = arith.constant 0 : i32
    %c0_i32_1 = arith.constant 0 : i32
    return %arg0, %c0_i32, %c0_i32_0 : i32, i32, i32
  }
}

</mosaic_0001>

<llo_original>
// kernel: tpu_custom_call.1
$region0: #{tpu_custom_call.1}
  #allocation0 [shape = 'u32[]', space=smem, size = 0x4, offset = 0x4, fixed_abs, tag = 'smem constant byte address 0x4 - core index']
  #allocation1 [shape = 'u32[72,128]{1,0:T(1,128)}', space=vmem, size = 0x9000, scoped, tag = 'internal scratch']
  #allocation2 [shape = 'f32[64,1]{1,0:T(8,128)}', space=vmem, size = 0x8000, scoped, tag = 'scratch operand']
  #allocation3 [shape = 'f32[64,1]{1,0:T(8,128)}', space=vmem, size = 0x8000, scoped, tag = 'scratch operand']
  %s0 = inlined_call_operand.hbm [shape: f32[2,64,256], index: 0, kind: input, shape index: {}]
  %s1 = inlined_call_operand.vmem [shape: f32[64,4], index: 1, kind: input, shape index: {}]
  %s2 = inlined_call_operand.vmem [shape: f32[64,4], index: 2, kind: input, shape index: {}]
  %s3 = inlined_call_operand.vmem [shape: f32[2,64,1], index: 3, kind: output, shape index: {}]
  %s4 = sld [smem:[#allocation0]]
  $region57: #{tpu_custom_call.1} parent=0
    _
  %s6 = ssub.s32 1, %s4
  %s7 = scalar_select 0, %s6, %s4
  $region1: #{tpu_custom_call.1} parent=0
    #allocation4 [shape = 'u8[131072]{0}', space=vmem, size = 0x20000, scoped, tag = 'input window, operand 0']
    #allocation5 [shape = 's32[2]{0}', space=sflag, size = 0x8, scoped, tag = 'scoped memory for tpu_custom_call.1']
    %8 = vsyncpa [#allocation5], 0
    %s9 = scalar_lea.sflag [#allocation5], 1
    %10 = vsyncpa %s9, 0
    loop: start=0, step=1, limit=4
    $region2: #{tpu_custom_call.1} parent=1 // loop_pre_header
      _
    $region3: #{tpu_custom_call.1} parent=1 // loop_header
      %s12 = sphi 0, %s16
      %p13 = scmp.ge.s32.totalorder %s12, 4
      %s19 = sphi 0, %s31
      %s20 = sphi 0, %s27
      %s21 = sphi 0, %s19
      %s22 = sphi 0, %s20
      %s23 = sphi 0, %s21
      %s24 = sphi 0, %s22
      %s36 = sphi 0, %s38
      %s39 = sphi 0, %s36
      %s40 = sphi 0, %s39
      %s56 = sphi 0, %s40
      %s60 = sphi 0, %s60
      %s62 = sphi 0, %s60
      %s63 = sphi 0, %s62
      %s77 = sphi 0, %s63
      %s81 = sphi 0, %s81
      %s83 = sphi 0, %s81
      %s84 = sphi 0, %s83
      %s98 = sphi 0, %s84
      %s104 = sphi 0, %s106
      %s107 = sphi 0, %s104
      %s108 = sphi 0, %s107
      %s124 = sphi 0, %s108
    $region4: #{tpu_custom_call.1} parent=1 // loop_header_branch
      %15 = sbr.rel (%p13) target = $region8
    $region5: #{tpu_custom_call.1} parent=1 // loop_body
      %s17 = ssub.s32 %s12, 1
      %s18 = ssub.s32 %s12, 2
      %s25 = sadd.s32 1, %s20
      %p26 = scmp.ge.s32.totalorder %s25, 1
      %s27 = scalar_select %p26, 0, %s25
      %s28 = sadd.s32 1, %s19
      %s29 = scalar_select %p26, %s28, %s19
      %p30 = scmp.ge.s32.totalorder %s29, 2
      %s31 = scalar_select %p30, 0, %s29
      %s32 = ssub.s32 %s19, %s31
      %s33 = ssub.s32 %s20, %s27
      %s34 = sor.u32 %s32, %s33
      %p35 = scmp.eq.s32.totalorder %s34, 0
      %s37 = sadd.s32 %s36, 1
      %s38 = scalar_select %p35, %s36, %s37
      %p41 = pneg %p35
      %p42 = scmp.eq.s32.totalorder %s12, 1
      %p43 = por %p41, %p42
      %p44 = scmp.ne.s32.totalorder %s36, %s39
      %p45 = scmp.eq.s32.totalorder %s12, 0
      %p46 = por %p44, %p45
      %p47 = scmp.ne.s32.totalorder %s36, %s39
      %p48 = scmp.eq.s32.totalorder %s17, 1
      %p49 = por %p47, %p48
      %p50 = scmp.ne.s32.totalorder %s39, %s40
      %p51 = scmp.eq.s32.totalorder %s17, 0
      %p52 = por %p50, %p51
      %p53 = scmp.ne.s32.totalorder %s39, %s40
      %p54 = scmp.eq.s32.totalorder %s18, 1
      %p55 = por %p53, %p54
      %p57 = scmp.ne.s32.totalorder %s40, %s56
      %p58 = scmp.eq.s32.totalorder %s18, 0
      %p59 = por %p57, %p58
      %s61 = sadd.s32 %s60, 1
      %p64 = scmp.eq.s32.totalorder %s12, 1
      %p65 = scmp.ne.s32.totalorder %s60, %s62
      %p66 = scmp.eq.s32.totalorder %s12, 0
      %p67 = por %p65, %p66
      %p68 = scmp.ne.s32.totalorder %s60, %s62
      %p69 = scmp.eq.s32.totalorder %s17, 1
      %p70 = por %p68, %p69
      %p71 = scmp.ne.s32.totalorder %s62, %s63
      %p72 = scmp.eq.s32.totalorder %s17, 0
      %p73 = por %p71, %p72
      %p74 = scmp.ne.s32.totalorder %s62, %s63
      %p75 = scmp.eq.s32.totalorder %s18, 1
      %p76 = por %p74, %p75
      %p78 = scmp.ne.s32.totalorder %s63, %s77
      %p79 = scmp.eq.s32.totalorder %s18, 0
      %p80 = por %p78, %p79
      %s82 = sadd.s32 %s81, 1
      %p85 = scmp.eq.s32.totalorder %s12, 1
      %p86 = scmp.ne.s32.totalorder %s81, %s83
      %p87 = scmp.eq.s32.totalorder %s12, 0
      %p88 = por %p86, %p87
      %p89 = scmp.ne.s32.totalorder %s81, %s83
      %p90 = scmp.eq.s32.totalorder %s17, 1
      %p91 = por %p89, %p90
      %p92 = scmp.ne.s32.totalorder %s83, %s84
      %p93 = scmp.eq.s32.totalorder %s17, 0
      %p94 = por %p92, %p93
      %p95 = scmp.ne.s32.totalorder %s83, %s84
      %p96 = scmp.eq.s32.totalorder %s18, 1
      %p97 = por %p95, %p96
      %p99 = scmp.ne.s32.totalorder %s84, %s98
      %p100 = scmp.eq.s32.totalorder %s18, 0
      %p101 = por %p99, %p100
      %s102 = ssub.s32 %s19, %s31
      %p103 = scmp.eq.s32.totalorder %s102, 0
      %s105 = sadd.s32 %s104, 1
      %s106 = scalar_select %p103, %s104, %s105
      %p109 = pneg %p103
      %p110 = scmp.eq.s32.totalorder %s12, 1
      %p111 = por %p109, %p110
      %p112 = scmp.ne.s32.totalorder %s104, %s107
      %p113 = scmp.eq.s32.totalorder %s12, 0
      %p114 = por %p112, %p113
      %p115 = scmp.ne.s32.totalorder %s104, %s107
      %p116 = scmp.eq.s32.totalorder %s17, 1
      %p117 = por %p115, %p116
      %p118 = scmp.ne.s32.totalorder %s107, %s108
      %p119 = scmp.eq.s32.totalorder %s17, 0
      %p120 = por %p118, %p119
      %p121 = scmp.ne.s32.totalorder %s107, %s108
      %p122 = scmp.eq.s32.totalorder %s18, 1
      %p123 = por %p121, %p122
      %p125 = scmp.ne.s32.totalorder %s108, %s124
      %p126 = scmp.eq.s32.totalorder %s18, 0
      %p127 = por %p125, %p126
      %p128 = scmp.le.s32.totalorder 1, %s12
      %p129 = scmp.lt.s32.totalorder %s12, 3
      %p130 = pnand %p128, %p129
      %p131 = pneg %p130
      // Predicated region
      $region9: #{tpu_custom_call.1} parent=5 // pred_check
        _
      $region10: #{tpu_custom_call.1} parent=5 // pred_check_branch
        %133 = sbr.rel (%p130) target = $region12
      $region11: #{tpu_custom_call.1} parent=5 // pred_region
        %s134 = ssub.s32 %s12, 1
        // Predicated region
        $region13: #{tpu_custom_call.1} parent=11 // pred_check
          %p135 = pneg %p73
        $region14: #{tpu_custom_call.1} parent=11 // pred_check_branch
          %137 = sbr.rel (%p135) target = $region16
        $region15: #{tpu_custom_call.1} parent=11 // pred_region
          _
        $region16: #{tpu_custom_call.1} parent=11 // pred_fallthru
          _
        // Predicated region
        $region17: #{tpu_custom_call.1} parent=11 // pred_check
          %p138 = pneg %p94
        $region18: #{tpu_custom_call.1} parent=11 // pred_check_branch
          %140 = sbr.rel (%p138) target = $region20
        $region19: #{tpu_custom_call.1} parent=11 // pred_region
          _
        $region20: #{tpu_custom_call.1} parent=11 // pred_fallthru
          _
      $region12: #{tpu_custom_call.1} parent=5 // pred_fallthru
        _
      %p141 = scmp.lt.s32.totalorder %s12, 2
      // Predicated region
      $region21: #{tpu_custom_call.1} parent=5 // pred_check
        %p142 = pneg %p141
      $region22: #{tpu_custom_call.1} parent=5 // pred_check_branch
        %144 = sbr.rel (%p142) target = $region24
      $region23: #{tpu_custom_call.1} parent=5 // pred_region
        // Predicated region
        $region25: #{tpu_custom_call.1} parent=23 // pred_check
          %p145 = pneg %p46
        $region26: #{tpu_custom_call.1} parent=23 // pred_check_branch
          %147 = sbr.rel (%p145) target = $region28
        $region27: #{tpu_custom_call.1} parent=23 // pred_region
          %s148 = sand.u32 %s36, 1
          %s149 = scalar_lea.sflag [#allocation5], %s148
          %s150 = sand.u32 %s36, 1
          %s151 = smul.addr %s150, 128
          %s152 = scalar_lea.vmem [#allocation4], %s151
          %s153 = smul.u32 2, %s20
          %155 = vsyncadd %s149, 0
          %s156 = smul.addr %s19, 16
          %s157 = sadd.s32 %s153, %s156
          %s158 = smul.addr %s157, 8
          %s159 = scalar_lea.hbm %s0, %s158
          %s160 = sshll.u32 %s159, 4
          %s161 = int_to_ptr.hbm [resolvable:$true] %s160
          %s162 = sshll.u32 %s152, 4
          %s163 = int_to_ptr.vmem [resolvable:$true] %s162
          %168 = dma.hbm_to_vmem [thread:$0]  %s161, 2048, %s163, %s149, 256, 256, 16
        $region28: #{tpu_custom_call.1} parent=23 // pred_fallthru
          _
      $region24: #{tpu_custom_call.1} parent=5 // pred_fallthru
        _
      %p169 = scmp.le.s32.totalorder 1, %s12
      %p170 = scmp.lt.s32.totalorder %s12, 3
      %p171 = pnand %p169, %p170
      %p172 = pneg %p171
      // Predicated region
      $region29: #{tpu_custom_call.1} parent=5 // pred_check
        _
      $region30: #{tpu_custom_call.1} parent=5 // pred_check_branch
        %174 = sbr.rel (%p171) target = $region32
      $region31: #{tpu_custom_call.1} parent=5 // pred_region
        %s175 = ssub.s32 %s12, 1
        %s176 = sand.u32 %s39, 1
        %s177 = scalar_lea.sflag [#allocation5], %s176
        %s178 = sand.u32 %s39, 1
        %s179 = smul.addr %s178, 128
        %s180 = scalar_lea.vmem [#allocation4], %s179
        // Predicated region
        $region33: #{tpu_custom_call.1} parent=31 // pred_check
          %p181 = pneg %p52
        $region34: #{tpu_custom_call.1} parent=31 // pred_check_branch
          %183 = sbr.rel (%p181) target = $region36
        $region35: #{tpu_custom_call.1} parent=31 // pred_region
          %185 = dma.done %s177, 2048
        $region36: #{tpu_custom_call.1} parent=31 // pred_fallthru
          _
        %s186 = sand.u32 %s39, 1
        %s187 = scalar_lea.sflag [#allocation5], %s186
        %s188 = sand.u32 %s39, 1
        %s189 = smul.addr %s188, 128
        %s190 = scalar_lea.vmem [#allocation4], %s189
        %p191 = pneg %p52
        %p192 = pneg %p49
        %p193 = pneg %p73
        %p194 = pneg %p70
        %p195 = pneg %p94
        %p196 = pneg %p91
        %p197 = pneg %p120
        %p198 = pneg %p117
        %p199 = scmp.lt.s32.totalorder %s21, 1
        %s200 = scalar_select %p199, %s21, 1
        %s201 = smul.addr %s200, 8
        %s202 = smul.addr %s201, 8
        %s203 = scalar_lea.vmem %s3, %s202
        %s204 = smul.u32 2, %s22
        %p205 = scmp.lt.s32.totalorder %s21, 1
        %s206 = scalar_select %p205, %s21, 1
        %s207 = smul.addr %s206, 8
        %s208 = smul.addr %s207, 8
        %s209 = scalar_lea.vmem %s3, %s208
        %p210 = scmp.eq.s32.totalorder %s22, 0
        // Predicated region
        $region37: #{tpu_custom_call.1} parent=31 // pred_check
          %p211 = pneg %p210
        $region38: #{tpu_custom_call.1} parent=31 // pred_check_branch
          %213 = sbr.rel (%p211) target = $region40
        $region39: #{tpu_custom_call.1} parent=31 // pred_region
          %vm214 = vcmask 7168
          %215 = vst.msk [vmem:[#allocation2] sm:$0xff] %vm214, 0.0
          %216 = vst.msk [vmem:[#allocation2 + $0x8] sm:$0xff] %vm214, 0.0
          %217 = vst.msk [vmem:[#allocation2 + $0x10] sm:$0xff] %vm214, 0.0
          %218 = vst.msk [vmem:[#allocation2 + $0x18] sm:$0xff] %vm214, 0.0
          %219 = vst.msk [vmem:[#allocation2 + $0x20] sm:$0xff] %vm214, 0.0
          %220 = vst.msk [vmem:[#allocation2 + $0x28] sm:$0xff] %vm214, 0.0
          %221 = vst.msk [vmem:[#allocation2 + $0x30] sm:$0xff] %vm214, 0.0
          %222 = vst.msk [vmem:[#allocation2 + $0x38] sm:$0xff] %vm214, 0.0
          %223 = vst.msk [vmem:[#allocation3] sm:$0xff] %vm214, -inf
          %224 = vst.msk [vmem:[#allocation3 + $0x8] sm:$0xff] %vm214, -inf
          %225 = vst.msk [vmem:[#allocation3 + $0x10] sm:$0xff] %vm214, -inf
          %226 = vst.msk [vmem:[#allocation3 + $0x18] sm:$0xff] %vm214, -inf
          %227 = vst.msk [vmem:[#allocation3 + $0x20] sm:$0xff] %vm214, -inf
          %228 = vst.msk [vmem:[#allocation3 + $0x28] sm:$0xff] %vm214, -inf
          %229 = vst.msk [vmem:[#allocation3 + $0x30] sm:$0xff] %vm214, -inf
          %230 = vst.msk [vmem:[#allocation3 + $0x38] sm:$0xff] %vm214, -inf
        $region40: #{tpu_custom_call.1} parent=31 // pred_fallthru
          _
        %v231 = vld [vmem:[%s180] sm:$0xff]
        %v232 = vld [vmem:[%s180 + $0x8] sm:$0xff]
        %v233 = vld [vmem:[%s180 + $0x10] sm:$0xff]
        %v234 = vld [vmem:[%s180 + $0x18] sm:$0xff]
        %v235 = vld [vmem:[%s180 + $0x20] sm:$0xff]
        %v236 = vld [vmem:[%s180 + $0x28] sm:$0xff]
        %v237 = vld [vmem:[%s180 + $0x30] sm:$0xff]
        %v238 = vld [vmem:[%s180 + $0x38] sm:$0xff]
        %v239 = vld [vmem:[%s180 + $0x40] sm:$0xff]
        %v240 = vld [vmem:[%s180 + $0x48] sm:$0xff]
        %v241 = vld [vmem:[%s180 + $0x50] sm:$0xff]
        %v242 = vld [vmem:[%s180 + $0x58] sm:$0xff]
        %v243 = vld [vmem:[%s180 + $0x60] sm:$0xff]
        %v244 = vld [vmem:[%s180 + $0x68] sm:$0xff]
        %v245 = vld [vmem:[%s180 + $0x70] sm:$0xff]
        %v246 = vld [vmem:[%s180 + $0x78] sm:$0xff]
        %v247 = vld [vmem:[#allocation2] sm:$0xff]
        %v248 = vld [vmem:[#allocation2 + $0x8] sm:$0xff]
        %v249 = vld [vmem:[#allocation2 + $0x10] sm:$0xff]
        %v250 = vld [vmem:[#allocation2 + $0x18] sm:$0xff]
        %v251 = vld [vmem:[#allocation2 + $0x20] sm:$0xff]
        %v252 = vld [vmem:[#allocation2 + $0x28] sm:$0xff]
        %v253 = vld [vmem:[#allocation2 + $0x30] sm:$0xff]
        %v254 = vld [vmem:[#allocation2 + $0x38] sm:$0xff]
        %v255 = vadd.f32 %v231, %v232
        %256 = vadd.xlane.f32.xlu0 %v255
        %v257 = vpop.xlane.xlu0 %256
        %v258 = vadd.f32 %v233, %v234
        %259 = vadd.xlane.f32.xlu0 %v258
        %v260 = vpop.xlane.xlu0 %259
        %v261 = vadd.f32 %v235, %v236
        %262 = vadd.xlane.f32.xlu0 %v261
        %v263 = vpop.xlane.xlu0 %262
        %v264 = vadd.f32 %v237, %v238
        %265 = vadd.xlane.f32.xlu0 %v264
        %v266 = vpop.xlane.xlu0 %265
        %v267 = vadd.f32 %v239, %v240
        %268 = vadd.xlane.f32.xlu0 %v267
        %v269 = vpop.xlane.xlu0 %268
        %v270 = vadd.f32 %v241, %v242
        %271 = vadd.xlane.f32.xlu0 %v270
        %v272 = vpop.xlane.xlu0 %271
        %v273 = vadd.f32 %v243, %v244
        %274 = vadd.xlane.f32.xlu0 %v273
        %v275 = vpop.xlane.xlu0 %274
        %v276 = vadd.f32 %v245, %v246
        %277 = vadd.xlane.f32.xlu0 %v276
        %v278 = vpop.xlane.xlu0 %277
        %v279 = vadd.f32 %v247, %v257
        %v280 = vadd.f32 %v248, %v260
        %v281 = vadd.f32 %v249, %v263
        %v282 = vadd.f32 %v250, %v266
        %v283 = vadd.f32 %v251, %v269
        %v284 = vadd.f32 %v252, %v272
        %v285 = vadd.f32 %v253, %v275
        %v286 = vadd.f32 %v254, %v278
        %vm287 = vcmask 7168
        %288 = vst.msk [vmem:[#allocation2] sm:$0xff] %vm287, %v279
        %289 = vst.msk [vmem:[#allocation2 + $0x8] sm:$0xff] %vm287, %v280
        %290 = vst.msk [vmem:[#allocation2 + $0x10] sm:$0xff] %vm287, %v281
        %291 = vst.msk [vmem:[#allocation2 + $0x18] sm:$0xff] %vm287, %v282
        %292 = vst.msk [vmem:[#allocation2 + $0x20] sm:$0xff] %vm287, %v283
        %293 = vst.msk [vmem:[#allocation2 + $0x28] sm:$0xff] %vm287, %v284
        %294 = vst.msk [vmem:[#allocation2 + $0x30] sm:$0xff] %vm287, %v285
        %295 = vst.msk [vmem:[#allocation2 + $0x38] sm:$0xff] %vm287, %v286
        %v296 = vld [vmem:[#allocation3] sm:$0xff]
        %v297 = vld [vmem:[#allocation3 + $0x8] sm:$0xff]
        %v298 = vld [vmem:[#allocation3 + $0x10] sm:$0xff]
        %v299 = vld [vmem:[#allocation3 + $0x18] sm:$0xff]
        %v300 = vld [vmem:[#allocation3 + $0x20] sm:$0xff]
        %v301 = vld [vmem:[#allocation3 + $0x28] sm:$0xff]
        %v302 = vld [vmem:[#allocation3 + $0x30] sm:$0xff]
        %v303 = vld [vmem:[#allocation3 + $0x38] sm:$0xff]
        %v304 = vmax.f32 %v231, %v232
        %305 = vmax.xlane.f32.xlu0 %v304
        %v306 = vpop.xlane.xlu0 %305
        %v307 = vmax.f32 %v233, %v234
        %308 = vmax.xlane.f32.xlu0 %v307
        %v309 = vpop.xlane.xlu0 %308
        %v310 = vmax.f32 %v235, %v236
        %311 = vmax.xlane.f32.xlu0 %v310
        %v312 = vpop.xlane.xlu0 %311
        %v313 = vmax.f32 %v237, %v238
        %314 = vmax.xlane.f32.xlu0 %v313
        %v315 = vpop.xlane.xlu0 %314
        %v316 = vmax.f32 %v239, %v240
        %317 = vmax.xlane.f32.xlu0 %v316
        %v318 = vpop.xlane.xlu0 %317
        %v319 = vmax.f32 %v241, %v242
        %320 = vmax.xlane.f32.xlu0 %v319
        %v321 = vpop.xlane.xlu0 %320
        %v322 = vmax.f32 %v243, %v244
        %323 = vmax.xlane.f32.xlu0 %v322
        %v324 = vpop.xlane.xlu0 %323
        %v325 = vmax.f32 %v245, %v246
        %326 = vmax.xlane.f32.xlu0 %v325
        %v327 = vpop.xlane.xlu0 %326
        %v328 = vmax.f32 %v296, %v306
        %v329 = vmax.f32 %v297, %v309
        %v330 = vmax.f32 %v298, %v312
        %v331 = vmax.f32 %v299, %v315
        %v332 = vmax.f32 %v300, %v318
        %v333 = vmax.f32 %v301, %v321
        %v334 = vmax.f32 %v302, %v324
        %v335 = vmax.f32 %v303, %v327
        %336 = vst.msk [vmem:[#allocation3] sm:$0xff] %vm287, %v328
        %337 = vst.msk [vmem:[#allocation3 + $0x8] sm:$0xff] %vm287, %v329
        %338 = vst.msk [vmem:[#allocation3 + $0x10] sm:$0xff] %vm287, %v330
        %339 = vst.msk [vmem:[#allocation3 + $0x18] sm:$0xff] %vm287, %v331
        %340 = vst.msk [vmem:[#allocation3 + $0x20] sm:$0xff] %vm287, %v332
        %341 = vst.msk [vmem:[#allocation3 + $0x28] sm:$0xff] %vm287, %v333
        %342 = vst.msk [vmem:[#allocation3 + $0x30] sm:$0xff] %vm287, %v334
        %343 = vst.msk [vmem:[#allocation3 + $0x38] sm:$0xff] %vm287, %v335
        // Predicated region
        $region41: #{tpu_custom_call.1} parent=31 // pred_check
          %p344 = pneg %p210
        $region42: #{tpu_custom_call.1} parent=31 // pred_check_branch
          %346 = sbr.rel (%p344) target = $region44
        $region43: #{tpu_custom_call.1} parent=31 // pred_region
          %v347 = vld [vmem:[#allocation2] sm:$0xff]
          %v348 = vld [vmem:[#allocation2 + $0x8] sm:$0xff]
          %v349 = vld [vmem:[#allocation2 + $0x10] sm:$0xff]
          %v350 = vld [vmem:[#allocation2 + $0x18] sm:$0xff]
          %v351 = vld [vmem:[#allocation2 + $0x20] sm:$0xff]
          %v352 = vld [vmem:[#allocation2 + $0x28] sm:$0xff]
          %v353 = vld [vmem:[#allocation2 + $0x30] sm:$0xff]
          %v354 = vld [vmem:[#allocation2 + $0x38] sm:$0xff]
          %v355 = vmul.f32 %v347, 0.00390625
          %v356 = vmul.f32 %v348, 0.00390625
          %v357 = vmul.f32 %v349, 0.00390625
          %v358 = vmul.f32 %v350, 0.00390625
          %v359 = vmul.f32 %v351, 0.00390625
          %v360 = vmul.f32 %v352, 0.00390625
          %v361 = vmul.f32 %v353, 0.00390625
          %v362 = vmul.f32 %v354, 0.00390625
          %v363 = vld [vmem:[#allocation3] sm:$0xff]
          %v364 = vld [vmem:[#allocation3 + $0x8] sm:$0xff]
          %v365 = vld [vmem:[#allocation3 + $0x10] sm:$0xff]
          %v366 = vld [vmem:[#allocation3 + $0x18] sm:$0xff]
          %v367 = vld [vmem:[#allocation3 + $0x20] sm:$0xff]
          %v368 = vld [vmem:[#allocation3 + $0x28] sm:$0xff]
          %v369 = vld [vmem:[#allocation3 + $0x30] sm:$0xff]
          %v370 = vld [vmem:[#allocation3 + $0x38] sm:$0xff]
          %v371 = vld [vmem:[%s1] sm:$0xff]
          %v372 = vld [vmem:[%s1 + $0x8] sm:$0xff]
          %v373 = vld [vmem:[%s1 + $0x10] sm:$0xff]
          %v374 = vld [vmem:[%s1 + $0x18] sm:$0xff]
          %v375 = vld [vmem:[%s1 + $0x20] sm:$0xff]
          %v376 = vld [vmem:[%s1 + $0x28] sm:$0xff]
          %v377 = vld [vmem:[%s1 + $0x30] sm:$0xff]
          %v378 = vld [vmem:[%s1 + $0x38] sm:$0xff]
          %v379 = vld [vmem:[%s2] sm:$0xff]
          %v380 = vld [vmem:[%s2 + $0x8] sm:$0xff]
          %v381 = vld [vmem:[%s2 + $0x10] sm:$0xff]
          %v382 = vld [vmem:[%s2 + $0x18] sm:$0xff]
          %v383 = vld [vmem:[%s2 + $0x20] sm:$0xff]
          %v384 = vld [vmem:[%s2 + $0x28] sm:$0xff]
          %v385 = vld [vmem:[%s2 + $0x30] sm:$0xff]
          %v386 = vld [vmem:[%s2 + $0x38] sm:$0xff]
          %388 = vset.pattern.permute.xlu0 0
          %389 = vperm.xlu0 %388, %v355
          %v390 = vpop.permute.xlu0 %389
          %393 = vset.pattern.permute.xlu0 0
          %394 = vperm.xlu0 %393, %v356
          %v395 = vpop.permute.xlu0 %394
          %398 = vset.pattern.permute.xlu0 0
          %399 = vperm.xlu0 %398, %v357
          %v400 = vpop.permute.xlu0 %399
          %403 = vset.pattern.permute.xlu0 0
          %404 = vperm.xlu0 %403, %v358
          %v405 = vpop.permute.xlu0 %404
          %408 = vset.pattern.permute.xlu0 0
          %409 = vperm.xlu0 %408, %v359
          %v410 = vpop.permute.xlu0 %409
          %413 = vset.pattern.permute.xlu0 0
          %414 = vperm.xlu0 %413, %v360
          %v415 = vpop.permute.xlu0 %414
          %418 = vset.pattern.permute.xlu0 0
          %419 = vperm.xlu0 %418, %v361
          %v420 = vpop.permute.xlu0 %419
          %423 = vset.pattern.permute.xlu0 0
          %424 = vperm.xlu0 %423, %v362
          %v425 = vpop.permute.xlu0 %424
          %v427 = vmul.f32 %v371, %v390
          %v428 = vmul.f32 %v372, %v395
          %v429 = vmul.f32 %v373, %v400
          %v430 = vmul.f32 %v374, %v405
          %v431 = vmul.f32 %v375, %v410
          %v432 = vmul.f32 %v376, %v415
          %v433 = vmul.f32 %v377, %v420
          %v434 = vmul.f32 %v378, %v425
          %vm435 = vcmask 31744
          %v436 = vsel %vm435, %v427, 0.0
          %v437 = vsel %vm435, %v428, 0.0
          %v438 = vadd.f32 %v436, %v437
          %v439 = vsel %vm435, %v429, 0.0
          %v440 = vadd.f32 %v438, %v439
          %v441 = vsel %vm435, %v430, 0.0
          %v442 = vadd.f32 %v440, %v441
          %v443 = vsel %vm435, %v431, 0.0
          %v444 = vadd.f32 %v442, %v443
          %v445 = vsel %vm435, %v432, 0.0
          %v446 = vadd.f32 %v444, %v445
          %v447 = vsel %vm435, %v433, 0.0
          %v448 = vadd.f32 %v446, %v447
          %v449 = vsel %vm435, %v434, 0.0
          %v450 = vadd.f32 %v448, %v449
          %v451 = vrot.slane %v450, 4
          %v452 = vadd.f32 %v450, %v451
          %v453 = vrot.slane %v452, 2
          %v454 = vadd.f32 %v452, %v453
          %v455 = vrot.slane %v454, 1
          %v456 = vadd.f32 %v454, %v455
          %v457 = vmax.f32 %v456, 0.0
          %459 = vset.pattern.permute.xlu0 0
          %460 = vperm.xlu0 %459, %v363
          %v461 = vpop.permute.xlu0 %460
          %464 = vset.pattern.permute.xlu0 0
          %465 = vperm.xlu0 %464, %v364
          %v466 = vpop.permute.xlu0 %465
          %469 = vset.pattern.permute.xlu0 0
          %470 = vperm.xlu0 %469, %v365
          %v471 = vpop.permute.xlu0 %470
          %474 = vset.pattern.permute.xlu0 0
          %475 = vperm.xlu0 %474, %v366
          %v476 = vpop.permute.xlu0 %475
          %479 = vset.pattern.permute.xlu0 0
          %480 = vperm.xlu0 %479, %v367
          %v481 = vpop.permute.xlu0 %480
          %484 = vset.pattern.permute.xlu0 0
          %485 = vperm.xlu0 %484, %v368
          %v486 = vpop.permute.xlu0 %485
          %489 = vset.pattern.permute.xlu0 0
          %490 = vperm.xlu0 %489, %v369
          %v491 = vpop.permute.xlu0 %490
          %494 = vset.pattern.permute.xlu0 0
          %495 = vperm.xlu0 %494, %v370
          %v496 = vpop.permute.xlu0 %495
          %v498 = vmul.f32 %v371, %v461
          %v499 = vmul.f32 %v372, %v466
          %v500 = vmul.f32 %v373, %v471
          %v501 = vmul.f32 %v374, %v476
          %v502 = vmul.f32 %v375, %v481
          %v503 = vmul.f32 %v376, %v486
          %v504 = vmul.f32 %v377, %v491
          %v505 = vmul.f32 %v378, %v496
          %v506 = vsel %vm435, %v498, 0.0
          %v507 = vsel %vm435, %v499, 0.0
          %v508 = vadd.f32 %v506, %v507
          %v509 = vsel %vm435, %v500, 0.0
          %v510 = vadd.f32 %v508, %v509
          %v511 = vsel %vm435, %v501, 0.0
          %v512 = vadd.f32 %v510, %v511
          %v513 = vsel %vm435, %v502, 0.0
          %v514 = vadd.f32 %v512, %v513
          %v515 = vsel %vm435, %v503, 0.0
          %v516 = vadd.f32 %v514, %v515
          %v517 = vsel %vm435, %v504, 0.0
          %v518 = vadd.f32 %v516, %v517
          %v519 = vsel %vm435, %v505, 0.0
          %v520 = vadd.f32 %v518, %v519
          %v521 = vrot.slane %v520, 4
          %v522 = vadd.f32 %v520, %v521
          %v523 = vrot.slane %v522, 2
          %v524 = vadd.f32 %v522, %v523
          %v525 = vrot.slane %v524, 1
          %v526 = vadd.f32 %v524, %v525
          %v527 = vmax.f32 %v526, 0.0
          %v528 = vadd.f32 %v457, %v527
          %v529 = vmul.f32 %v379, %v528
          %v530 = vmul.f32 %v380, %v528
          %v531 = vmul.f32 %v381, %v528
          %v532 = vmul.f32 %v382, %v528
          %v533 = vmul.f32 %v383, %v528
          %v534 = vmul.f32 %v384, %v528
          %v535 = vmul.f32 %v385, %v528
          %v536 = vmul.f32 %v386, %v528
          %v537 = vsel %vm435, %v529, 0.0
          %538 = vadd.xlane.f32.xlu0 %v537
          %v539 = vpop.xlane.xlu0 %538
          %v540 = vsel %vm435, %v530, 0.0
          %541 = vadd.xlane.f32.xlu0 %v540
          %v542 = vpop.xlane.xlu0 %541
          %v543 = vsel %vm435, %v531, 0.0
          %544 = vadd.xlane.f32.xlu0 %v543
          %v545 = vpop.xlane.xlu0 %544
          %v546 = vsel %vm435, %v532, 0.0
          %547 = vadd.xlane.f32.xlu0 %v546
          %v548 = vpop.xlane.xlu0 %547
          %v549 = vsel %vm435, %v533, 0.0
          %550 = vadd.xlane.f32.xlu0 %v549
          %v551 = vpop.xlane.xlu0 %550
          %v552 = vsel %vm435, %v534, 0.0
          %553 = vadd.xlane.f32.xlu0 %v552
          %v554 = vpop.xlane.xlu0 %553
          %v555 = vsel %vm435, %v535, 0.0
          %556 = vadd.xlane.f32.xlu0 %v555
          %v557 = vpop.xlane.xlu0 %556
          %v558 = vsel %vm435, %v536, 0.0
          %559 = vadd.xlane.f32.xlu0 %v558
          %v560 = vpop.xlane.xlu0 %559
          %v561 = vxor.u32 %v539, 2147483648
          %v562 = vxor.u32 %v542, 2147483648
          %v563 = vxor.u32 %v545, 2147483648
          %v564 = vxor.u32 %v548, 2147483648
          %v565 = vxor.u32 %v551, 2147483648
          %v566 = vxor.u32 %v554, 2147483648
          %v567 = vxor.u32 %v557, 2147483648
          %v568 = vxor.u32 %v560, 2147483648
          %v569 = vmul.f32 %v561, 1.442695
          %v570 = vpow.pop %v569
          %v571 = vmul.f32 %v562, 1.442695
          %v572 = vpow.pop %v571
          %v573 = vmul.f32 %v563, 1.442695
          %v574 = vpow.pop %v573
          %v575 = vmul.f32 %v564, 1.442695
          %v576 = vpow.pop %v575
          %v577 = vmul.f32 %v565, 1.442695
          %v578 = vpow.pop %v577
          %v579 = vmul.f32 %v566, 1.442695
          %v580 = vpow.pop %v579
          %v581 = vmul.f32 %v567, 1.442695
          %v582 = vpow.pop %v581
          %v583 = vmul.f32 %v568, 1.442695
          %v584 = vpow.pop %v583
          %v585 = vadd.f32 %v570, 1.0
          %v586 = vadd.f32 %v572, 1.0
          %v587 = vadd.f32 %v574, 1.0
          %v588 = vadd.f32 %v576, 1.0
          %v589 = vadd.f32 %v578, 1.0
          %v590 = vadd.f32 %v580, 1.0
          %v591 = vadd.f32 %v582, 1.0
          %v592 = vadd.f32 %v584, 1.0
          %v593 = vrcp.pop %v585
          %v594 = vmul.f32 %v585, %v593
          %v595 = vsub.f32 1.0, %v594
          %v596 = vmul.f32 %v593, %v595
          %v597 = vadd.f32 %v593, %v596
          %vm598 = vweird.f32 %v585
          %vm599 = vweird.f32 %v593
          %vm600 = vmor %vm598, %vm599
          %v601 = vsel %vm600, %v593, %v597
          %v602 = vand.u32 2147483647, %v585
          %vm603 = vcmp.eq.f32.partialorder %v602, 8.507059e+37
          %v604 = vand.u32 %v585, 2147483648
          %v605 = vor.u32 1.1754944e-38, %v604
          %v606 = vsel %vm603, %v605, %v601
          %v607 = vmul.f32 1.0, %v606
          %v608 = vrcp.pop %v586
          %v609 = vmul.f32 %v586, %v608
          %v610 = vsub.f32 1.0, %v609
          %v611 = vmul.f32 %v608, %v610
          %v612 = vadd.f32 %v608, %v611
          %vm613 = vweird.f32 %v586
          %vm614 = vweird.f32 %v608
          %vm615 = vmor %vm613, %vm614
          %v616 = vsel %vm615, %v608, %v612
          %v617 = vand.u32 2147483647, %v586
          %vm618 = vcmp.eq.f32.partialorder %v617, 8.507059e+37
          %v619 = vand.u32 %v586, 2147483648
          %v620 = vor.u32 1.1754944e-38, %v619
          %v621 = vsel %vm618, %v620, %v616
          %v622 = vmul.f32 1.0, %v621
          %v623 = vrcp.pop %v587
          %v624 = vmul.f32 %v587, %v623
          %v625 = vsub.f32 1.0, %v624
          %v626 = vmul.f32 %v623, %v625
          %v627 = vadd.f32 %v623, %v626
          %vm628 = vweird.f32 %v587
          %vm629 = vweird.f32 %v623
          %vm630 = vmor %vm628, %vm629
          %v631 = vsel %vm630, %v623, %v627
          %v632 = vand.u32 2147483647, %v587
          %vm633 = vcmp.eq.f32.partialorder %v632, 8.507059e+37
          %v634 = vand.u32 %v587, 2147483648
          %v635 = vor.u32 1.1754944e-38, %v634
          %v636 = vsel %vm633, %v635, %v631
          %v637 = vmul.f32 1.0, %v636
          %v638 = vrcp.pop %v588
          %v639 = vmul.f32 %v588, %v638
          %v640 = vsub.f32 1.0, %v639
          %v641 = vmul.f32 %v638, %v640
          %v642 = vadd.f32 %v638, %v641
          %vm643 = vweird.f32 %v588
          %vm644 = vweird.f32 %v638
          %vm645 = vmor %vm643, %vm644
          %v646 = vsel %vm645, %v638, %v642
          %v647 = vand.u32 2147483647, %v588
          %vm648 = vcmp.eq.f32.partialorder %v647, 8.507059e+37
          %v649 = vand.u32 %v588, 2147483648
          %v650 = vor.u32 1.1754944e-38, %v649
          %v651 = vsel %vm648, %v650, %v646
          %v652 = vmul.f32 1.0, %v651
          %v653 = vrcp.pop %v589
          %v654 = vmul.f32 %v589, %v653
          %v655 = vsub.f32 1.0, %v654
          %v656 = vmul.f32 %v653, %v655
          %v657 = vadd.f32 %v653, %v656
          %vm658 = vweird.f32 %v589
          %vm659 = vweird.f32 %v653
          %vm660 = vmor %vm658, %vm659
          %v661 = vsel %vm660, %v653, %v657
          %v662 = vand.u32 2147483647, %v589
          %vm663 = vcmp.eq.f32.partialorder %v662, 8.507059e+37
          %v664 = vand.u32 %v589, 2147483648
          %v665 = vor.u32 1.1754944e-38, %v664
          %v666 = vsel %vm663, %v665, %v661
          %v667 = vmul.f32 1.0, %v666
          %v668 = vrcp.pop %v590
          %v669 = vmul.f32 %v590, %v668
          %v670 = vsub.f32 1.0, %v669
          %v671 = vmul.f32 %v668, %v670
          %v672 = vadd.f32 %v668, %v671
          %vm673 = vweird.f32 %v590
          %vm674 = vweird.f32 %v668
          %vm675 = vmor %vm673, %vm674
          %v676 = vsel %vm675, %v668, %v672
          %v677 = vand.u32 2147483647, %v590
          %vm678 = vcmp.eq.f32.partialorder %v677, 8.507059e+37
          %v679 = vand.u32 %v590, 2147483648
          %v680 = vor.u32 1.1754944e-38, %v679
          %v681 = vsel %vm678, %v680, %v676
          %v682 = vmul.f32 1.0, %v681
          %v683 = vrcp.pop %v591
          %v684 = vmul.f32 %v591, %v683
          %v685 = vsub.f32 1.0, %v684
          %v686 = vmul.f32 %v683, %v685
          %v687 = vadd.f32 %v683, %v686
          %vm688 = vweird.f32 %v591
          %vm689 = vweird.f32 %v683
          %vm690 = vmor %vm688, %vm689
          %v691 = vsel %vm690, %v683, %v687
          %v692 = vand.u32 2147483647, %v591
          %vm693 = vcmp.eq.f32.partialorder %v692, 8.507059e+37
          %v694 = vand.u32 %v591, 2147483648
          %v695 = vor.u32 1.1754944e-38, %v694
          %v696 = vsel %vm693, %v695, %v691
          %v697 = vmul.f32 1.0, %v696
          %v698 = vrcp.pop %v592
          %v699 = vmul.f32 %v592, %v698
          %v700 = vsub.f32 1.0, %v699
          %v701 = vmul.f32 %v698, %v700
          %v702 = vadd.f32 %v698, %v701
          %vm703 = vweird.f32 %v592
          %vm704 = vweird.f32 %v698
          %vm705 = vmor %vm703, %vm704
          %v706 = vsel %vm705, %v698, %v702
          %v707 = vand.u32 2147483647, %v592
          %vm708 = vcmp.eq.f32.partialorder %v707, 8.507059e+37
          %v709 = vand.u32 %v592, 2147483648
          %v710 = vor.u32 1.1754944e-38, %v709
          %v711 = vsel %vm708, %v710, %v706
          %v712 = vmul.f32 1.0, %v711
          %713 = vst.msk [vmem:[%s209] sm:$0xff] %vm287, %v607
          %714 = vst.msk [vmem:[%s209 + $0x8] sm:$0xff] %vm287, %v622
          %715 = vst.msk [vmem:[%s209 + $0x10] sm:$0xff] %vm287, %v637
          %716 = vst.msk [vmem:[%s209 + $0x18] sm:$0xff] %vm287, %v652
          %717 = vst.msk [vmem:[%s209 + $0x20] sm:$0xff] %vm287, %v667
          %718 = vst.msk [vmem:[%s209 + $0x28] sm:$0xff] %vm287, %v682
          %719 = vst.msk [vmem:[%s209 + $0x30] sm:$0xff] %vm287, %v697
          %720 = vst.msk [vmem:[%s209 + $0x38] sm:$0xff] %vm287, %v712
        $region44: #{tpu_custom_call.1} parent=31 // pred_fallthru
          _
        %p721 = scmp.lt.s32.totalorder %s21, 1
        %s722 = scalar_select %p721, %s21, 1
        %s723 = smul.addr %s722, 8
        %s724 = smul.addr %s723, 8
        %s725 = scalar_lea.vmem %s3, %s724
        // Predicated region
        $region45: #{tpu_custom_call.1} parent=31 // pred_check
          %p726 = pneg %p117
        $region46: #{tpu_custom_call.1} parent=31 // pred_check_branch
          %728 = sbr.rel (%p726) target = $region48
        $region47: #{tpu_custom_call.1} parent=31 // pred_region
          _
        $region48: #{tpu_custom_call.1} parent=31 // pred_fallthru
          _
      $region32: #{tpu_custom_call.1} parent=5 // pred_fallthru
        _
      %p729 = scmp.le.s32.totalorder 2, %s12
      // Predicated region
      $region49: #{tpu_custom_call.1} parent=5 // pred_check
        %p730 = pneg %p729
      $region50: #{tpu_custom_call.1} parent=5 // pred_check_branch
        %732 = sbr.rel (%p730) target = $region52
      $region51: #{tpu_custom_call.1} parent=5 // pred_region
        %s733 = ssub.s32 %s12, 2
        // Predicated region
        $region53: #{tpu_custom_call.1} parent=51 // pred_check
          %p734 = pneg %p123
        $region54: #{tpu_custom_call.1} parent=51 // pred_check_branch
          %736 = sbr.rel (%p734) target = $region56
        $region55: #{tpu_custom_call.1} parent=51 // pred_region
          %p737 = scmp.lt.s32.totalorder %s23, 1
          %s738 = scalar_select %p737, %s23, 1
          %s739 = smul.addr %s738, 8
          %s740 = smul.addr %s739, 8
          %s741 = scalar_lea.vmem %s3, %s740
        $region56: #{tpu_custom_call.1} parent=51 // pred_fallthru
          _
      $region52: #{tpu_custom_call.1} parent=5 // pred_fallthru
        _
    $region6: #{tpu_custom_call.1} parent=1 // loop_footer
      %s16 = sadd.s32 1, %s12
    $region7: #{tpu_custom_call.1} parent=1 // loop_footer_branch
      %11 = sbr.rel target = $region3
    $region8: #{tpu_custom_call.1} parent=1 // loop_exit
      _
    %742 = vsyncpa [#allocation5], 1
    %s743 = scalar_lea.sflag [#allocation5], 1
    %744 = vsyncpa %s743, 1

</llo_original>
